<compile_context>
chip_gen: v7x
topology: tpu7x:2x2x1
jax: 0.10.0
libtpu: 0.0.40
codegen_flags: <defaults>
</compile_context>

<pallas_src>
import jax
import jax.numpy as jnp
from jax.experimental import pallas as pl
from jax.experimental.pallas import tpu as pltpu


def _round_up(x, m):
    return (x + m - 1) // m * m


def nc1_loss_kernel(x_ref, means_ref, labels_ref, loss_ref, d_acc, n_acc):
    step = pl.program_id(0)

    @pl.when(step == 0)
    def _init():
        d_acc[...] = jnp.zeros_like(d_acc)
        n_acc[...] = jnp.zeros_like(n_acc)

    x = x_ref[...]                 # (TB, D) native dtype
    mu = means_ref[...]            # (C, D)  native dtype
    labels = labels_ref[...]       # (TB, 1) int32

    tb = x.shape[0]
    num_classes = mu.shape[0]

    # One-hot class mask; padded rows carry label = -1 -> all-zero row.
    classes = jax.lax.broadcasted_iota(jnp.int32, (tb, num_classes), 1)
    onehot = labels == classes                                     # (TB, C) bool

    # Gather each sample's class mean with a single MXU matmul in the input
    # dtype (f32 accumulation).  No (TB, C) distmat is materialized.
    mu_sel = jax.lax.dot_general(
        onehot.astype(mu.dtype), mu,
        dimension_numbers=(((1,), (0,)), ((), ())),
        preferred_element_type=jnp.float32)                        # (TB, D) f32

    diff = x.astype(jnp.float32) - mu_sel
    d_b = jnp.sum(diff * diff, axis=1, keepdims=True)              # (TB, 1) f32

    mask_f = onehot.astype(jnp.float32)
    d_acc[...] += jnp.sum(mask_f * d_b, axis=0, keepdims=True)     # (1, C)
    n_acc[...] += jnp.sum(mask_f, axis=0, keepdims=True)           # (1, C)

    @pl.when(step == pl.num_programs(0) - 1)
    def _finalize():
        n = n_acc[...] + 1e-10
        per_class = jnp.clip(d_acc[...] / n, 1e-12, 1e12)
        loss_ref[0, 0] = jnp.sum(per_class) / num_classes


def nc1_loss(x, means, labels, *, batch_tile=128):
    """Returns (loss, means), matching NC1Loss.forward."""
    B, D = x.shape
    C, D2 = means.shape
    assert D == D2

    # Batch tile: multiple of 8 sublanes, at most `batch_tile`; pad batch so it
    # divides evenly (padded rows use x=0 / label=-1 and contribute nothing).
    tb = min(batch_tile, _round_up(B, 8))
    Bp = _round_up(B, tb)
    labels_i32 = labels.astype(jnp.int32)
    if Bp != B:
        x_p = jnp.pad(x, ((0, Bp - B), (0, 0)))
        labels_i32 = jnp.pad(labels_i32, (0, Bp - B), constant_values=-1)
    else:
        x_p = x
    labels2d = labels_i32.reshape(Bp, 1)

    grid = (Bp // tb,)

    # Note: for very large num_classes, the scalable variant gathers only the
    # needed mean rows via PrefetchScalarGridSpec + pl.Element index_map so the
    # full (C, D) table never has to be VMEM-resident.
    loss = pl.pallas_call(
        nc1_loss_kernel,
        out_shape=jax.ShapeDtypeStruct((1, 1), jnp.float32),
        grid_spec=pltpu.PrefetchScalarGridSpec(
            num_scalar_prefetch=0,
            grid=grid,
            in_specs=[
                pl.BlockSpec((tb, D), lambda i: (i, 0)),    # x batch tile
                pl.BlockSpec((C, D), lambda i: (0, 0)),     # means, resident
                pl.BlockSpec((tb, 1), lambda i: (i, 0)),    # labels batch tile
            ],
            out_specs=pl.BlockSpec(memory_space=pltpu.MemorySpace.SMEM),
            scratch_shapes=[
                pltpu.VMEM((1, C), jnp.float32),   # per-class distance sums
                pltpu.VMEM((1, C), jnp.float32),   # per-class counts
            ],
        ),
        compiler_params=pltpu.CompilerParams(
            # Batch axis reduces into the scratch accumulators -> "arbitrary".
            dimension_semantics=("arbitrary",),
        ),
    )(x_p, means, labels2d)

    return loss[0, 0], means


def nc1_loss_reference(x, means, labels):
    """Pure-JAX reference mirroring the PyTorch forward (expansion form)."""
    C = means.shape[0]
    distmat = (
        jnp.sum(x * x, axis=1, keepdims=True)
        + jnp.sum(means * means, axis=1, keepdims=True).T
        - 2.0 * x @ means.T
    )
    mask = (labels[:, None] == jnp.arange(C)[None, :]).astype(jnp.float32)
    dist = distmat * mask
    D = jnp.sum(dist, axis=0)
    N = jnp.sum(mask, axis=0) + 1e-10
    return jnp.sum(jnp.clip(D / N, 1e-12, 1e12)) / C


if __name__ == "__main__":
    num_classes = 10
    feat_dim = 128
    batch = 20  # deliberately not a multiple of the batch tile (tests padding)

    key = jax.random.PRNGKey(0)
    k_means, k_x, k_lab = jax.random.split(key, 3)

    # Deterministic "parameter" init (stand-in for torch.randn(num_classes, feat_dim)).
    means = jax.random.normal(k_means, (num_classes, feat_dim), dtype=jnp.float32)
    x = jax.random.normal(k_x, (batch, feat_dim), dtype=jnp.float32)
    labels = jax.random.randint(k_lab, (batch,), 0, num_classes, dtype=jnp.int32)

    # batch_tile=8 exercises the multi-step grid + accumulator path even at this
    # tiny demo size; real workloads keep the default (128).
    loss, means_out = nc1_loss(x, means, labels, batch_tile=8)
    loss = jax.block_until_ready(loss)
    means_out = jax.block_until_ready(means_out)

    ref = nc1_loss_reference(x, means, labels)
    assert jnp.allclose(loss, ref, rtol=1e-4, atol=1e-4), (loss, ref)

    print("KERNEL_OK")
</pallas_src>

<mosaic_0001>
module attributes {stable_mosaic.version = 11 : i64} {
  func.func @nc1_loss_kernel(%arg0: i32, %arg1: memref<8x128xf32, #tpu.memory_space<vmem>>, %arg2: memref<10x128xf32, #tpu.memory_space<vmem>>, %arg3: memref<8x1xi32, #tpu.memory_space<vmem>>, %arg4: memref<1x1xf32, #tpu.memory_space<smem>>, %arg5: memref<1x10xf32, #tpu.memory_space<vmem>>, %arg6: memref<1x10xf32, #tpu.memory_space<vmem>>) attributes {dimension_semantics = [#tpu.dimension_semantics<arbitrary>], iteration_bounds = array<i64: 3>, scalar_prefetch = 0 : i64, scratch_operands = 2 : i64, tpu.core_type = #tpu.core_type<tc>, window_params = [{transform_indices = @transform_0, window_bounds = array<i64: 8, 128>}, {pipeline_mode = #tpu.pipeline_mode<synchronous>, transform_indices = @transform_1, window_bounds = array<i64: 10, 128>}, {transform_indices = @transform_2, window_bounds = array<i64: 8, 1>}, {transform_indices = @transform_3, window_bounds = array<i64: 1, 1>}]} {
    %c0_i32 = arith.constant 0 : i32
    %0 = arith.cmpi eq, %arg0, %c0_i32 : i32
    %1 = arith.extui %0 : i1 to i32
    %c0_i32_0 = arith.constant 0 : i32
    %2 = arith.cmpi ne, %1, %c0_i32_0 : i32
    scf.if %2 {
      %cst_18 = arith.constant 0.000000e+00 : f32
      %33 = vector.broadcast %cst_18 : f32 to vector<1x10xf32>
      %c0_19 = arith.constant 0 : index
      %c0_20 = arith.constant 0 : index
      %34 = vector.load %arg5[%c0_19, %c0_20] : memref<1x10xf32, #tpu.memory_space<vmem>>, vector<1x10xf32>
      tpu.vector_store %arg5[%c0_19, %c0_20], %33 {strides = array<i32>} : memref<1x10xf32, #tpu.memory_space<vmem>>, vector<1x10xf32>,
      %cst_21 = arith.constant 0.000000e+00 : f32
      %35 = vector.broadcast %cst_21 : f32 to vector<1x10xf32>
      %c0_22 = arith.constant 0 : index
      %c0_23 = arith.constant 0 : index
      %36 = vector.load %arg6[%c0_22, %c0_23] : memref<1x10xf32, #tpu.memory_space<vmem>>, vector<1x10xf32>
      tpu.vector_store %arg6[%c0_22, %c0_23], %35 {strides = array<i32>} : memref<1x10xf32, #tpu.memory_space<vmem>>, vector<1x10xf32>,
    } else {
    }
    %c0 = arith.constant 0 : index
    %c0_1 = arith.constant 0 : index
    %3 = vector.load %arg1[%c0, %c0_1] : memref<8x128xf32, #tpu.memory_space<vmem>>, vector<8x128xf32>
    %c0_2 = arith.constant 0 : index
    %c0_3 = arith.constant 0 : index
    %4 = vector.load %arg2[%c0_2, %c0_3] : memref<10x128xf32, #tpu.memory_space<vmem>>, vector<10x128xf32>
    %c0_4 = arith.constant 0 : index
    %c0_5 = arith.constant 0 : index
    %5 = vector.load %arg3[%c0_4, %c0_5] : memref<8x1xi32, #tpu.memory_space<vmem>>, vector<8x1xi32>
    %6 = tpu.iota {dimensions = array<i32: 1>} : vector<8x10xi32>
    %7 = vector.broadcast %5 : vector<8x1xi32> to vector<8x10xi32>
    %8 = arith.cmpi eq, %7, %6 : vector<8x10xi32>
    %9 = arith.extui %8 : vector<8x10xi1> to vector<8x10xi32>
    %10 = arith.sitofp %9 : vector<8x10xi32> to vector<8x10xf32>
    %cst = arith.constant dense<0.000000e+00> : vector<8x128xf32>
    %11 = tpu.matmul %10, %4, %cst {dimension_numbers = #tpu.dot_dimension_numbers<[1], [0], [0], [1], [0, 0, 1, 1], [], []>} : vector<8x10xf32>, vector<10x128xf32>, vector<8x128xf32> -> vector<8x128xf32>
    %12 = arith.subf %3, %11 : vector<8x128xf32>
    %13 = arith.mulf %12, %12 : vector<8x128xf32>
    %cst_6 = arith.constant dense<0.000000e+00> : vector<8xf32>
    %14 = vector.multi_reduction <add>, %13, %cst_6 [1] : vector<8x128xf32> to vector<8xf32>
    %15 = vector.shape_cast %14 : vector<8xf32> to vector<8x1xf32>
    %16 = arith.extui %8 : vector<8x10xi1> to vector<8x10xi32>
    %17 = arith.sitofp %16 : vector<8x10xi32> to vector<8x10xf32>
    %c0_7 = arith.constant 0 : index
    %c0_8 = arith.constant 0 : index
    %18 = vector.load %arg5[%c0_7, %c0_8] : memref<1x10xf32, #tpu.memory_space<vmem>>, vector<1x10xf32>
    %19 = vector.broadcast %15 : vector<8x1xf32> to vector<8x10xf32>
    %20 = arith.mulf %17, %19 : vector<8x10xf32>
    %cst_9 = arith.constant dense<0.000000e+00> : vector<10xf32>
    %21 = vector.multi_reduction <add>, %20, %cst_9 [0] : vector<8x10xf32> to vector<10xf32>
    %22 = vector.shape_cast %21 : vector<10xf32> to vector<1x10xf32>
    %23 = arith.addf %18, %22 : vector<1x10xf32>
    %c0_10 = arith.constant 0 : index
    %c0_11 = arith.constant 0 : index
    %24 = vector.load %arg5[%c0_10, %c0_11] : memref<1x10xf32, #tpu.memory_space<vmem>>, vector<1x10xf32>
    tpu.vector_store %arg5[%c0_10, %c0_11], %23 {strides = array<i32>} : memref<1x10xf32, #tpu.memory_space<vmem>>, vector<1x10xf32>,
    %c0_12 = arith.constant 0 : index
    %c0_13 = arith.constant 0 : index
    %25 = vector.load %arg6[%c0_12, %c0_13] : memref<1x10xf32, #tpu.memory_space<vmem>>, vector<1x10xf32>
    %cst_14 = arith.constant dense<0.000000e+00> : vector<10xf32>
    %26 = vector.multi_reduction <add>, %17, %cst_14 [0] : vector<8x10xf32> to vector<10xf32>
    %27 = vector.shape_cast %26 : vector<10xf32> to vector<1x10xf32>
    %28 = arith.addf %25, %27 : vector<1x10xf32>
    %c0_15 = arith.constant 0 : index
    %c0_16 = arith.constant 0 : index
    %29 = vector.load %arg6[%c0_15, %c0_16] : memref<1x10xf32, #tpu.memory_space<vmem>>, vector<1x10xf32>
    tpu.vector_store %arg6[%c0_15, %c0_16], %28 {strides = array<i32>} : memref<1x10xf32, #tpu.memory_space<vmem>>, vector<1x10xf32>,
    %c2_i32 = arith.constant 2 : i32
    %30 = arith.cmpi eq, %arg0, %c2_i32 : i32
    %31 = arith.extui %30 : i1 to i32
    %c0_i32_17 = arith.constant 0 : i32
    %32 = arith.cmpi ne, %31, %c0_i32_17 : i32
    scf.if %32 {
      %c0_18 = arith.constant 0 : index
      %c0_19 = arith.constant 0 : index
      %33 = vector.load %arg6[%c0_18, %c0_19] : memref<1x10xf32, #tpu.memory_space<vmem>>, vector<1x10xf32>
      %cst_20 = arith.constant 1.000000e-10 : f32
      %34 = vector.broadcast %cst_20 : f32 to vector<1x10xf32>
      %35 = arith.addf %33, %34 : vector<1x10xf32>
      %c0_21 = arith.constant 0 : index
      %c0_22 = arith.constant 0 : index
      %36 = vector.load %arg5[%c0_21, %c0_22] : memref<1x10xf32, #tpu.memory_space<vmem>>, vector<1x10xf32>
      %37 = arith.divf %36, %35 : vector<1x10xf32>
      %cst_23 = arith.constant 9.99999996E-13 : f32
      %cst_24 = arith.constant 9.99999995E+11 : f32
      %38 = vector.broadcast %cst_23 : f32 to vector<1x10xf32>
      %39 = arith.maximumf %38, %37 : vector<1x10xf32>
      %40 = vector.broadcast %cst_24 : f32 to vector<1x10xf32>
      %41 = arith.minimumf %40, %39 : vector<1x10xf32>
      %42 = vector.shape_cast %41 : vector<1x10xf32> to vector<1x1x10xf32>
      %cst_25 = arith.constant dense<0.000000e+00> : vector<1xf32>
      %43 = vector.multi_reduction <add>, %42, %cst_25 [1, 2] : vector<1x1x10xf32> to vector<1xf32>
      %44 = vector.shape_cast %43 : vector<1xf32> to vector<1x1x1xf32>
      %45 = vector.extract %44[0, 0, 0] : f32 from vector<1x1x1xf32>
      %cst_26 = arith.constant 1.000000e+01 : f32
      %46 = arith.divf %45, %cst_26 : f32
      %c0_27 = arith.constant 0 : index
      %c0_28 = arith.constant 0 : index
      %47 = memref.load %arg4[%c0_27, %c0_28] : memref<1x1xf32, #tpu.memory_space<smem>>
      memref.store %46, %arg4[%c0_27, %c0_28] : memref<1x1xf32, #tpu.memory_space<smem>>
    } else {
    }
    return
  }
  func.func @transform_0(%arg0: i32) -> (i32, i32) {
    %c0_i32 = arith.constant 0 : i32
    %c0_i32_0 = arith.constant 0 : i32
    return %arg0, %c0_i32 : i32, i32
  }
  func.func @transform_1(%arg0: i32) -> (i32, i32) {
    %c0_i32 = arith.constant 0 : i32
    %c0_i32_0 = arith.constant 0 : i32
    %c0_i32_1 = arith.constant 0 : i32
    return %c0_i32, %c0_i32_0 : i32, i32
  }
  func.func @transform_2(%arg0: i32) -> (i32, i32) {
    %c0_i32 = arith.constant 0 : i32
    %c0_i32_0 = arith.constant 0 : i32
    return %arg0, %c0_i32 : i32, i32
  }
  func.func @transform_3(%arg0: i32) -> (i32, i32) {
    %c0_i32 = arith.constant 0 : i32
    %c0_i32_0 = arith.constant 0 : i32
    %c0_i32_1 = arith.constant 0 : i32
    return %c0_i32, %c0_i32_0 : i32, i32
  }
}

</mosaic_0001>

<llo_original>
// kernel: tpu_custom_call.1
$region0: #{tpu_custom_call.1}
  #allocation0 [shape = 'u32[]', space=smem, size = 0x4, offset = 0x4, fixed_abs, tag = 'smem constant byte address 0x4 - core index']
  #allocation1 [shape = 'u32[144,128]{1,0:T(1,128)}', space=vmem, size = 0x12000, scoped, tag = 'internal scratch']
  #allocation2 [shape = 'f32[1,10]{1,0:T(1,128)}', space=vmem, size = 0x200, scoped, tag = 'scratch operand']
  #allocation3 [shape = 'f32[1,10]{1,0:T(1,128)}', space=vmem, size = 0x200, scoped, tag = 'scratch operand']
  %s0 = inlined_call_operand.vmem [shape: f32[24,128], index: 0, kind: input, shape index: {}]
  %s1 = inlined_call_operand.hbm [shape: f32[10,128], index: 1, kind: input, shape index: {}]
  %s2 = inlined_call_operand.vmem [shape: s32[24,1], index: 2, kind: input, shape index: {}]
  %s3 = inlined_call_operand.hbm [shape: f32[1,1], index: 3, kind: output, shape index: {}]
  %s4 = sld [smem:[#allocation0]]
  $region57: #{tpu_custom_call.1} parent=0
    _
  %s6 = ssub.s32 1, %s4
  %s7 = scalar_select 0, %s6, %s4
  $region1: #{tpu_custom_call.1} parent=0
    #allocation4 [shape = 'u8[8192]{0}', space=vmem, size = 0x2000, scoped, tag = 'input window, operand 1, single buffered']
    #allocation5 [shape = 's32[2]{0}', space=sflag, size = 0x8, scoped, tag = 'scoped memory for tpu_custom_call.1']
    #allocation6 [shape = 's32[2]{0}', space=sflag, size = 0x8, scoped, tag = 'scoped memory for tpu_custom_call.1']
    #allocation7 [shape = 'u8[512]{0}', space=smem, size = 0x200, scoped, tag = 'output window, operand 0, single buffered']
    %8 = vsyncpa [#allocation5], 0
    %9 = vsyncpa [#allocation6], 0
    loop: start=0, step=1, limit=5
    $region2: #{tpu_custom_call.1} parent=1 // loop_pre_header
      _
    $region3: #{tpu_custom_call.1} parent=1 // loop_header
      %s11 = sphi 0, %s15
      %p12 = scmp.ge.s32.totalorder %s11, 5
      %s21 = sphi 0, %s23
      %s24 = sphi 0, %s21
      %s25 = sphi 0, %s24
      %s41 = sphi 0, %s25
      %s45 = sphi 0, %s45
      %s47 = sphi 0, %s45
      %s48 = sphi 0, %s47
      %s62 = sphi 0, %s48
      %s68 = sphi 0, %s70
      %s71 = sphi 0, %s68
      %s72 = sphi 0, %s71
      %s88 = sphi 0, %s72
      %s92 = sphi 0, %s92
      %s94 = sphi 0, %s92
      %s95 = sphi 0, %s94
      %s109 = sphi 0, %s95
    $region4: #{tpu_custom_call.1} parent=1 // loop_header_branch
      %14 = sbr.rel (%p12) target = $region8
    $region5: #{tpu_custom_call.1} parent=1 // loop_body
      %s16 = ssub.s32 %s11, 1
      %s17 = ssub.s32 %s11, 2
      %s18 = sadd.s32 %s11, 1
      %s19 = ssub.s32 %s11, %s18
      %p20 = scmp.eq.s32.totalorder %s19, 0
      %s22 = sadd.s32 %s21, 1
      %s23 = scalar_select %p20, %s21, %s22
      %p26 = pneg %p20
      %p27 = scmp.eq.s32.totalorder %s11, 2
      %p28 = por %p26, %p27
      %p29 = scmp.ne.s32.totalorder %s21, %s24
      %p30 = scmp.eq.s32.totalorder %s11, 0
      %p31 = por %p29, %p30
      %p32 = scmp.ne.s32.totalorder %s21, %s24
      %p33 = scmp.eq.s32.totalorder %s16, 2
      %p34 = por %p32, %p33
      %p35 = scmp.ne.s32.totalorder %s24, %s25
      %p36 = scmp.eq.s32.totalorder %s16, 0
      %p37 = por %p35, %p36
      %p38 = scmp.ne.s32.totalorder %s24, %s25
      %p39 = scmp.eq.s32.totalorder %s17, 2
      %p40 = por %p38, %p39
      %p42 = scmp.ne.s32.totalorder %s25, %s41
      %p43 = scmp.eq.s32.totalorder %s17, 0
      %p44 = por %p42, %p43
      %s46 = sadd.s32 %s45, 1
      %p49 = scmp.eq.s32.totalorder %s11, 2
      %p50 = scmp.ne.s32.totalorder %s45, %s47
      %p51 = scmp.eq.s32.totalorder %s11, 0
      %p52 = por %p50, %p51
      %p53 = scmp.ne.s32.totalorder %s45, %s47
      %p54 = scmp.eq.s32.totalorder %s16, 2
      %p55 = por %p53, %p54
      %p56 = scmp.ne.s32.totalorder %s47, %s48
      %p57 = scmp.eq.s32.totalorder %s16, 0
      %p58 = por %p56, %p57
      %p59 = scmp.ne.s32.totalorder %s47, %s48
      %p60 = scmp.eq.s32.totalorder %s17, 2
      %p61 = por %p59, %p60
      %p63 = scmp.ne.s32.totalorder %s48, %s62
      %p64 = scmp.eq.s32.totalorder %s17, 0
      %p65 = por %p63, %p64
      %s66 = ssub.s32 %s11, %s18
      %p67 = scmp.eq.s32.totalorder %s66, 0
      %s69 = sadd.s32 %s68, 1
      %s70 = scalar_select %p67, %s68, %s69
      %p73 = pneg %p67
      %p74 = scmp.eq.s32.totalorder %s11, 2
      %p75 = por %p73, %p74
      %p76 = scmp.ne.s32.totalorder %s68, %s71
      %p77 = scmp.eq.s32.totalorder %s11, 0
      %p78 = por %p76, %p77
      %p79 = scmp.ne.s32.totalorder %s68, %s71
      %p80 = scmp.eq.s32.totalorder %s16, 2
      %p81 = por %p79, %p80
      %p82 = scmp.ne.s32.totalorder %s71, %s72
      %p83 = scmp.eq.s32.totalorder %s16, 0
      %p84 = por %p82, %p83
      %p85 = scmp.ne.s32.totalorder %s71, %s72
      %p86 = scmp.eq.s32.totalorder %s17, 2
      %p87 = por %p85, %p86
      %p89 = scmp.ne.s32.totalorder %s72, %s88
      %p90 = scmp.eq.s32.totalorder %s17, 0
      %p91 = por %p89, %p90
      %s93 = sadd.s32 %s92, 1
      %p96 = scmp.eq.s32.totalorder %s11, 2
      %p97 = scmp.ne.s32.totalorder %s92, %s94
      %p98 = scmp.eq.s32.totalorder %s11, 0
      %p99 = por %p97, %p98
      %p100 = scmp.ne.s32.totalorder %s92, %s94
      %p101 = scmp.eq.s32.totalorder %s16, 2
      %p102 = por %p100, %p101
      %p103 = scmp.ne.s32.totalorder %s94, %s95
      %p104 = scmp.eq.s32.totalorder %s16, 0
      %p105 = por %p103, %p104
      %p106 = scmp.ne.s32.totalorder %s94, %s95
      %p107 = scmp.eq.s32.totalorder %s17, 2
      %p108 = por %p106, %p107
      %p110 = scmp.ne.s32.totalorder %s95, %s109
      %p111 = scmp.eq.s32.totalorder %s17, 0
      %p112 = por %p110, %p111
      %p113 = scmp.le.s32.totalorder 1, %s11
      %p114 = scmp.lt.s32.totalorder %s11, 4
      %p115 = pnand %p113, %p114
      %p116 = pneg %p115
      // Predicated region
      $region9: #{tpu_custom_call.1} parent=5 // pred_check
        _
      $region10: #{tpu_custom_call.1} parent=5 // pred_check_branch
        %118 = sbr.rel (%p115) target = $region12
      $region11: #{tpu_custom_call.1} parent=5 // pred_region
        %s119 = ssub.s32 %s11, 1
        // Predicated region
        $region13: #{tpu_custom_call.1} parent=11 // pred_check
          %p120 = pneg %p58
        $region14: #{tpu_custom_call.1} parent=11 // pred_check_branch
          %122 = sbr.rel (%p120) target = $region16
        $region15: #{tpu_custom_call.1} parent=11 // pred_region
          %s124 = ssub.s32 256, 256
          %125 = vsyncadd [#allocation5], %s124
          %s126 = sshll.u32 [#allocation4], 4
          %s127 = int_to_ptr.vmem [resolvable:$true] %s126
          %132 = dma.hbm_to_vmem [thread:$0]  %s1, 256, %s127, [#allocation5], 128, 128, 8
        $region16: #{tpu_custom_call.1} parent=11 // pred_fallthru
          _
      $region12: #{tpu_custom_call.1} parent=5 // pred_fallthru
        _
      %p133 = scmp.lt.s32.totalorder %s11, 3
      // Predicated region
      $region17: #{tpu_custom_call.1} parent=5 // pred_check
        %p134 = pneg %p133
      $region18: #{tpu_custom_call.1} parent=5 // pred_check_branch
        %136 = sbr.rel (%p134) target = $region20
      $region19: #{tpu_custom_call.1} parent=5 // pred_region
        // Predicated region
        $region21: #{tpu_custom_call.1} parent=19 // pred_check
          %p137 = pneg %p31
        $region22: #{tpu_custom_call.1} parent=19 // pred_check_branch
          %139 = sbr.rel (%p137) target = $region24
        $region23: #{tpu_custom_call.1} parent=19 // pred_region
          %p140 = scmp.lt.s32.totalorder %s11, 2
          %s141 = scalar_select %p140, %s11, 2
          %s142 = smul.addr %s141, 8
          %s143 = scalar_lea.vmem %s0, %s142
        $region24: #{tpu_custom_call.1} parent=19 // pred_fallthru
          _
        // Predicated region
        $region25: #{tpu_custom_call.1} parent=19 // pred_check
          %p144 = pneg %p78
        $region26: #{tpu_custom_call.1} parent=19 // pred_check_branch
          %146 = sbr.rel (%p144) target = $region28
        $region27: #{tpu_custom_call.1} parent=19 // pred_region
          %p147 = scmp.lt.s32.totalorder %s11, 2
          %s148 = scalar_select %p147, %s11, 2
          %s149 = smul.addr %s148, 8
          %s150 = scalar_lea.vmem %s2, %s149
        $region28: #{tpu_custom_call.1} parent=19 // pred_fallthru
          _
      $region20: #{tpu_custom_call.1} parent=5 // pred_fallthru
        _
      %p151 = scmp.le.s32.totalorder 1, %s11
      %p152 = scmp.lt.s32.totalorder %s11, 4
      %p153 = pnand %p151, %p152
      %p154 = pneg %p153
      // Predicated region
      $region29: #{tpu_custom_call.1} parent=5 // pred_check
        _
      $region30: #{tpu_custom_call.1} parent=5 // pred_check_branch
        %156 = sbr.rel (%p153) target = $region32
      $region31: #{tpu_custom_call.1} parent=5 // pred_region
        %s157 = ssub.s32 %s11, 1
        // Predicated region
        $region33: #{tpu_custom_call.1} parent=31 // pred_check
          %p158 = pneg %p58
        $region34: #{tpu_custom_call.1} parent=31 // pred_check_branch
          %160 = sbr.rel (%p158) target = $region36
        $region35: #{tpu_custom_call.1} parent=31 // pred_region
          %161 = dma.done [#allocation5], 256
        $region36: #{tpu_custom_call.1} parent=31 // pred_fallthru
          _
        %p162 = scmp.lt.s32.totalorder %s16, 2
        %s163 = scalar_select %p162, %s16, 2
        %s164 = smul.addr %s163, 8
        %s165 = scalar_lea.vmem %s0, %s164
        %p166 = pneg %p37
        %p167 = pneg %p34
        %p168 = pneg %p58
        %p169 = pneg %p55
        %p170 = scmp.lt.s32.totalorder %s16, 2
        %s171 = scalar_select %p170, %s16, 2
        %s172 = smul.addr %s171, 8
        %s173 = scalar_lea.vmem %s2, %s172
        %p174 = pneg %p84
        %p175 = pneg %p81
        %p176 = pneg %p105
        %p177 = pneg %p102
        %p178 = scmp.lt.s32.totalorder %s16, 2
        %s179 = scalar_select %p178, %s16, 2
        %s180 = smul.addr %s179, 8
        %s181 = scalar_lea.vmem %s0, %s180
        %p182 = scmp.lt.s32.totalorder %s16, 2
        %s183 = scalar_select %p182, %s16, 2
        %s184 = smul.addr %s183, 8
        %s185 = scalar_lea.vmem %s2, %s184
        %p186 = scmp.eq.s32.totalorder %s16, 0
        // Predicated region
        $region37: #{tpu_custom_call.1} parent=31 // pred_check
          %p187 = pneg %p186
        $region38: #{tpu_custom_call.1} parent=31 // pred_check_branch
          %189 = sbr.rel (%p187) target = $region40
        $region39: #{tpu_custom_call.1} parent=31 // pred_region
          %vm190 = vcmask 73728
          %191 = vst.msk [vmem:[#allocation2] sm:$0x1] %vm190, 0.0
          %192 = vst.msk [vmem:[#allocation3] sm:$0x1] %vm190, 0.0
        $region40: #{tpu_custom_call.1} parent=31 // pred_fallthru
          _
        %v193 = vld [vmem:[%s181] sm:$0xff]
        %v194 = vld [vmem:[#allocation4] sm:$0xff]
        %v195 = vld [vmem:[#allocation4 + $0x8] sm:$0x3]
        %v196 = vld [vmem:[%s185] sm:$0xff]
        %v197 = vlaneseq
        %v198 = vand.u32 %v197, 127
        %199 = vset.pattern.permute.xlu0 0
        %200 = vperm.xlu0 %199, %v196
        %v201 = vpop.permute.xlu0 %200
        %vm202 = vcmp.eq.s32.totalorder %v201, %v198
        %v203 = vsel %vm202, 1, 0
        %v204 = vcvt.s32.f32 %v203
        %vm205 = vcmask 80896
        %v207 = vsel %vm205, %v204, 0
        %vm209 = vcmask 1041408
        %v211 = vsel %vm209, %v195, 0
        %213 = vmatprep.subr.mxu0 0.0
        %214 = vmatpush1.msra.mxu0 %v194
        %215 = vmatprep.subr.mxu0 0.0
        %216 = vmatpush1.msra.mxu0 %v211
        %217 = vmatprep.subr.mxu0 0.0
        %218 = vmatpush1.msra.mxu0 0.0
        %219 = vmatprep.subr.mxu0 0.0
        %220 = vmatpush1.msra.mxu0 0.0
        %221 = vmatprep.subr.mxu0 0.0
        %222 = vmatpush1.msra.mxu0 0.0
        %223 = vmatprep.subr.mxu0 0.0
        %224 = vmatpush1.msra.mxu0 0.0
        %225 = vmatprep.subr.mxu0 0.0
        %226 = vmatpush1.msra.mxu0 0.0
        %227 = vmatprep.subr.mxu0 0.0
        %228 = vmatpush1.msra.mxu0 0.0
        %229 = vmatprep.subr.mxu0 0.0
        %230 = vmatpush1.msra.mxu0 0.0
        %231 = vmatprep.subr.mxu0 0.0
        %232 = vmatpush1.msra.mxu0 0.0
        %233 = vmatprep.subr.mxu0 0.0
        %234 = vmatpush1.msra.mxu0 0.0
        %235 = vmatprep.subr.mxu0 0.0
        %236 = vmatpush1.msra.mxu0 0.0
        %237 = vmatprep.subr.mxu0 0.0
        %238 = vmatpush1.msra.mxu0 0.0
        %239 = vmatprep.subr.mxu0 0.0
        %240 = vmatpush1.msra.mxu0 0.0
        %241 = vmatprep.subr.mxu0 0.0
        %242 = vmatpush1.msra.mxu0 0.0
        %243 = vmatprep.subr.mxu0 0.0
        %244 = vmatpush1.msra.mxu0 0.0
        %245 = vmatprep.subr.mxu0 0.0
        %246 = vmatpush1.msra.mxu0 0.0
        %247 = vmatprep.subr.mxu0 0.0
        %248 = vmatpush1.msra.mxu0 0.0
        %249 = vmatprep.subr.mxu0 0.0
        %250 = vmatpush1.msra.mxu0 0.0
        %251 = vmatprep.subr.mxu0 0.0
        %252 = vmatpush1.msra.mxu0 0.0
        %253 = vmatprep.subr.mxu0 0.0
        %254 = vmatpush1.msra.mxu0 0.0
        %255 = vmatprep.subr.mxu0 0.0
        %256 = vmatpush1.msra.mxu0 0.0
        %257 = vmatprep.subr.mxu0 0.0
        %258 = vmatpush1.msra.mxu0 0.0
        %259 = vmatprep.subr.mxu0 0.0
        %260 = vmatpush1.msra.mxu0 0.0
        %261 = vmatprep.subr.mxu0 0.0
        %262 = vmatpush1.msra.mxu0 0.0
        %263 = vmatprep.subr.mxu0 0.0
        %264 = vmatpush1.msra.mxu0 0.0
        %265 = vmatprep.subr.mxu0 0.0
        %266 = vmatpush1.msra.mxu0 0.0
        %267 = vmatprep.subr.mxu0 0.0
        %268 = vmatpush1.msra.mxu0 0.0
        %269 = vmatprep.subr.mxu0 0.0
        %270 = vmatpush1.msra.mxu0 0.0
        %271 = vmatprep.subr.mxu0 0.0
        %272 = vmatpush1.msra.mxu0 0.0
        %273 = vmatprep.subr.mxu0 0.0
        %274 = vmatpush1.msra.mxu0 0.0
        %275 = vmatprep.subr.mxu0 0.0
        %276 = vmatpush1.msra.mxu0 0.0
        %277 = vmatprep.mubr.f32.mxu0 0.0
        %278 = vmatmul.mubr.f32.gmra.mrb[0].mxu0 %v207
        %v279 = vpop.f32.mrb[0].mxu0
        %v280 = vadd.f32 0.0, %v279
        %v281 = vpop.f32.mrb[0].mxu0
        %282 = vdwg.mxu0
        %v283 = vsub.f32 %v193, %v280
        %v284 = vmul.f32 %v283, %v283
        %285 = vadd.xlane.f32.xlu0 %v284
        %v286 = vpop.xlane.xlu0 %285
        %v287 = vld [vmem:[#allocation2] sm:$0x1]
        %v288 = vmul.f32 %v204, %v286
        %v289 = vsel %vm205, %v288, 0.0
        %v290 = vrot.slane %v289, 4
        %v291 = vadd.f32 %v289, %v290
        %v292 = vrot.slane %v291, 2
        %v293 = vadd.f32 %v291, %v292
        %v294 = vrot.slane %v293, 1
        %v295 = vadd.f32 %v293, %v294
        %v296 = vadd.f32 %v287, %v295
        %vm297 = vcmask 73728
        %298 = vst.msk [vmem:[#allocation2] sm:$0x1] %vm297, %v296
        %v299 = vld [vmem:[#allocation3] sm:$0x1]
        %v300 = vsel %vm205, %v204, 0.0
        %v301 = vrot.slane %v300, 4
        %v302 = vadd.f32 %v300, %v301
        %v303 = vrot.slane %v302, 2
        %v304 = vadd.f32 %v302, %v303
        %v305 = vrot.slane %v304, 1
        %v306 = vadd.f32 %v304, %v305
        %v307 = vadd.f32 %v299, %v306
        %308 = vst.msk [vmem:[#allocation3] sm:$0x1] %vm297, %v307
        %p309 = scmp.eq.s32.totalorder %s16, 2
        // Predicated region
        $region41: #{tpu_custom_call.1} parent=31 // pred_check
          %p310 = pneg %p309
        $region42: #{tpu_custom_call.1} parent=31 // pred_check_branch
          %312 = sbr.rel (%p310) target = $region44
        $region43: #{tpu_custom_call.1} parent=31 // pred_region
          %v313 = vld [vmem:[#allocation3] sm:$0x1]
          %v314 = vadd.f32 %v313, 1e-10
          %v315 = vld [vmem:[#allocation2] sm:$0x1]
          %v316 = vrcp.pop %v314
          %v317 = vmul.f32 %v315, %v316
          %v318 = vmax.f32 %v317, 1e-12
          %v319 = vmin.f32 %v318, 1e+12
          %v320 = vsel %vm297, %v319, 0.0
          %321 = vadd.xlane.f32.xlu0 %v320
          %v322 = vpop.xlane.xlu0 %321
          %v323 = vrot.slane %v322, 4
          %v324 = vadd.f32 %v322, %v323
          %v325 = vrot.slane %v324, 2
          %v326 = vadd.f32 %v324, %v325
          %v327 = vrot.slane %v326, 1
          %v328 = vadd.f32 %v326, %v327
          %s329 = vtos %v328
          %v330 = vrcp.pop 10.0
          %s331 = vtos %v330
          %s332 = smul.f32 %s329, %s331
          %s333 = scalar_lea.smem [#allocation7], 0
          %334 = sst [smem:[%s333]] %s332
        $region44: #{tpu_custom_call.1} parent=31 // pred_fallthru
          _
        // Predicated region
        $region45: #{tpu_custom_call.1} parent=31 // pred_check
          %p335 = pneg %p102
        $region46: #{tpu_custom_call.1} parent=31 // pred_check_branch
          %337 = sbr.rel (%p335) target = $region48
        $region47: #{tpu_custom_call.1} parent=31 // pred_region
          %s339 = ssub.s32 16, 16
          %340 = vsyncadd [#allocation6], %s339
          %343 = dma.smem_to_hbm [#allocation7], 16, %s3, [#allocation6]
        $region48: #{tpu_custom_call.1} parent=31 // pred_fallthru
          _
        // Predicated region
        $region49: #{tpu_custom_call.1} parent=31 // pred_check
          %p344 = pneg %p102
        $region50: #{tpu_custom_call.1} parent=31 // pred_check_branch
          %346 = sbr.rel (%p344) target = $region52
        $region51: #{tpu_custom_call.1} parent=31 // pred_region
          %347 = dma.done [#allocation6], 16
        $region52: #{tpu_custom_call.1} parent=31 // pred_fallthru
          _
        %348 = sfence
      $region32: #{tpu_custom_call.1} parent=5 // pred_fallthru
        _
      %p349 = scmp.le.s32.totalorder 2, %s11
      // Predicated region
      $region53: #{tpu_custom_call.1} parent=5 // pred_check
        %p350 = pneg %p349
      $region54: #{tpu_custom_call.1} parent=5 // pred_check_branch
        %352 = sbr.rel (%p350) target = $region56
      $region55: #{tpu_custom_call.1} parent=5 // pred_region
        %s353 = ssub.s32 %s11, 2
      $region56: #{tpu_custom_call.1} parent=5 // pred_fallthru
        _
    $region6: #{tpu_custom_call.1} parent=1 // loop_footer
      %s15 = sadd.s32 1, %s11
    $region7: #{tpu_custom_call.1} parent=1 // loop_footer_branch
      %10 = sbr.rel target = $region3
    $region8: #{tpu_custom_call.1} parent=1 // loop_exit
      _
    %354 = vsyncpa [#allocation5], 1
    %s355 = scalar_lea.sflag [#allocation5], 1
    %356 = vsyncpa %s355, 1
    %357 = vsyncpa [#allocation6], 1
    %s358 = scalar_lea.sflag [#allocation6], 1
    %359 = vsyncpa %s358, 1

</llo_original>
